<compile_context>
chip_gen: v7x
topology: tpu7x:2x2x1
jax: 0.10.0
libtpu: 0.0.40
codegen_flags: <defaults>
</compile_context>

<pallas_src>
import jax
import jax.numpy as jnp
from jax import lax
from jax.experimental import pallas as pl
from jax.experimental.pallas import tpu as pltpu


def _round_up(x, m):
    return ((x + m - 1) // m) * m


def _dnn_kernel(x_ref,
                w1_ref, b1_ref,
                w2_ref, b2_ref,
                wh1_ref, bh1_ref,
                wh2_ref, bh2_ref,
                q_ref):
    """One batch tile.  Weights stay VMEM-resident across all tiles."""
    relu = lambda t: jnp.maximum(t, 0.0)
    cdt = w1_ref.dtype  # bf16 compute dtype for MXU operands

    def dense(x_f32, w_ref, b_ref):
        y = jnp.dot(x_f32.astype(cdt), w_ref[...],
                    preferred_element_type=jnp.float32)
        return relu(y + b_ref[...])                       # bias/ReLU in f32

    h1 = dense(x_ref[...], w1_ref, b1_ref)                # (TB, 512)
    h2 = dense(h1, w2_ref, b2_ref)                        # (TB, 256)
    h3 = dense(h2, wh1_ref, bh1_ref)                      # (TB, 384) [adv1|val1|0]
    h4 = dense(h3, wh2_ref, bh2_ref)                      # (TB, ADVP)

    advp = q_ref.shape[-1]
    val_col = advp - 2                                    # val2 output column
    sum_col = advp - 1                                    # spare column (zero in h4)

    val = h4[:, val_col:val_col + 1]                      # (TB, 1)
    # Columns [A, val_col) and sum_col are exactly zero by weight construction,
    # so the true per-row adv sum is sum(h4) - val.
    rowsum = jnp.sum(h4, axis=1, keepdims=True) - val     # (TB, 1)

    q_pre = h4 + val                                      # cols [0, A) are val + adv
    col = lax.broadcasted_iota(jnp.int32, q_pre.shape, 1)
    # One unmasked, lane-dense store: q_pre in cols [0, A), rowsum in sum_col.
    q_ref[...] = jnp.where(col == sum_col, rowsum, q_pre)


def prepare_params(params, action_dim, compute_dtype=jnp.bfloat16):
    """Fuse adv/val heads and cast weights to the MXU compute dtype."""
    A = action_dim
    advp = _round_up(A + 2, 128)                          # head width (+val +spare col)
    val_col = advp - 2
    h1w = _round_up(256 + 64, 128)                        # 384

    wh1 = jnp.zeros((256, h1w), jnp.float32)
    wh1 = wh1.at[:, :256].set(params["wa1"]).at[:, 256:320].set(params["wv1"])
    bh1 = jnp.zeros((1, h1w), jnp.float32)
    bh1 = bh1.at[:, :256].set(params["ba1"]).at[:, 256:320].set(params["bv1"])

    wh2 = jnp.zeros((h1w, advp), jnp.float32)
    wh2 = wh2.at[:256, :A].set(params["wa2"])
    wh2 = wh2.at[256:320, val_col:val_col + 1].set(params["wv2"])
    bh2 = jnp.zeros((1, advp), jnp.float32)
    bh2 = bh2.at[:, :A].set(params["ba2"])
    bh2 = bh2.at[:, val_col:val_col + 1].set(params["bv2"])

    return {
        "w1": params["w1"].astype(compute_dtype), "b1": params["b1"],
        "w2": params["w2"].astype(compute_dtype), "b2": params["b2"],
        "wh1": wh1.astype(compute_dtype), "bh1": bh1,
        "wh2": wh2.astype(compute_dtype), "bh2": bh2,
    }


def dnn_forward(state, fp, action_dim, *, block_b=None):
    """state: (B, state_dim_1*state_dim_2) f32. Returns (B, action_dim) f32."""
    B, in_dim = state.shape
    advp = fp["wh2"].shape[1]
    sum_col = advp - 1

    if block_b is None:
        block_b = min(256, _round_up(B, 8))               # TB: 256, or tiny-B case
    block_b = _round_up(block_b, 8)
    Bp = _round_up(B, block_b)
    if Bp != B:
        state = jnp.pad(state, ((0, Bp - B), (0, 0)))     # zero rows, sliced off later
    nb = Bp // block_b

    weight_args = (fp["w1"], fp["b1"], fp["w2"], fp["b2"],
                   fp["wh1"], fp["bh1"], fp["wh2"], fp["bh2"])
    w_specs = [pl.BlockSpec(w.shape, lambda i: (0, 0)) for w in weight_args]

    weight_bytes = sum(int(w.size) * w.dtype.itemsize for w in weight_args)
    flops = 2 * Bp * (in_dim * 512 + 512 * 256 + 256 * 384 + 384 * advp)
    bytes_accessed = weight_bytes + Bp * (in_dim * 4 + advp * 4)

    q_out = pl.pallas_call(
        _dnn_kernel,
        grid=(nb,),
        in_specs=[pl.BlockSpec((block_b, in_dim), lambda i: (i, 0))] + w_specs,
        out_specs=pl.BlockSpec((block_b, advp), lambda i: (i, 0)),
        out_shape=jax.ShapeDtypeStruct((Bp, advp), jnp.float32),
        compiler_params=pltpu.CompilerParams(
            dimension_semantics=("parallel",),
            vmem_limit_bytes=32 * 1024 * 1024),
        cost_estimate=pl.CostEstimate(flops=flops, transcendentals=0,
                                      bytes_accessed=bytes_accessed),
    )(state, *weight_args)

    # Finish the GLOBAL mean outside the kernel (keeps batch tiles independent
    # and preserves the module's adv.mean() over batch AND action dims).
    adv_mean = jnp.sum(q_out[:B, sum_col]) / (B * action_dim)
    return q_out[:B, :action_dim] - adv_mean


def init_params(key, in_dim, action_dim):
    """Layer shapes of the module.  Weights ~ U(-0.1, 0.1) (final step of the
    module's _init_weights); biases ~ PyTorch Linear default
    U(-1/sqrt(fan_in), 1/sqrt(fan_in)).  Weights stored transposed (in, out)."""
    dims = {
        "1":  (in_dim, 512),
        "2":  (512, 256),
        "a1": (256, 256),
        "a2": (256, action_dim),
        "v1": (256, 64),
        "v2": (64, 1),
    }
    params = {}
    keys = jax.random.split(key, 2 * len(dims))
    for i, (name, (fi, fo)) in enumerate(dims.items()):
        wk, bk = keys[2 * i], keys[2 * i + 1]
        bound = 1.0 / (fi ** 0.5)
        params["w" + name] = jax.random.uniform(wk, (fi, fo), jnp.float32, -0.1, 0.1)
        params["b" + name] = jax.random.uniform(bk, (1, fo), jnp.float32, -bound, bound)
    return params


def dnn_reference(state, params, compute_dtype=jnp.bfloat16):
    """Pure-JAX reference with the ORIGINAL (unfused) layer structure, using
    the same bf16-weight / f32-accumulate numerics as the kernel."""
    relu = lambda t: jnp.maximum(t, 0.0)

    def dense(x, w, b):
        y = jnp.dot(x.astype(compute_dtype), w.astype(compute_dtype),
                    preferred_element_type=jnp.float32)
        return relu(y + b)

    h1 = dense(state, params["w1"], params["b1"])
    h2 = dense(h1, params["w2"], params["b2"])
    adv = dense(h2, params["wa1"], params["ba1"])
    adv = dense(adv, params["wa2"], params["ba2"])
    val = dense(h2, params["wv1"], params["bv1"])
    val = dense(val, params["wv2"], params["bv2"])
    return val + (adv - jnp.mean(adv))


if __name__ == "__main__":
    # Small shapes consistent with the module: state flattened (dim1 * dim2).
    state_dim_1, state_dim_2, action_dim = 4, 16, 8
    batch = 2
    in_dim = state_dim_1 * state_dim_2

    key = jax.random.PRNGKey(0)
    pkey, xkey = jax.random.split(key)
    params = init_params(pkey, in_dim, action_dim)
    state = jax.random.normal(xkey, (batch, in_dim), jnp.float32)

    fused = prepare_params(params, action_dim)
    q = dnn_forward(state, fused, action_dim)
    q = jax.block_until_ready(q)

    q_ref = dnn_reference(state, params)
    assert q.shape == (batch, action_dim)
    assert jnp.allclose(q, q_ref, atol=5e-3, rtol=5e-3), "mismatch vs reference"

    print("KERNEL_OK")
</pallas_src>

<mosaic_0001>
module attributes {stable_mosaic.version = 11 : i64} {
  func.func @_dnn_kernel(%arg0: i32, %arg1: memref<8x64xf32, #tpu.memory_space<vmem>>, %arg2: memref<64x512xbf16, #tpu.memory_space<vmem>>, %arg3: memref<1x512xf32, #tpu.memory_space<vmem>>, %arg4: memref<512x256xbf16, #tpu.memory_space<vmem>>, %arg5: memref<1x256xf32, #tpu.memory_space<vmem>>, %arg6: memref<256x384xbf16, #tpu.memory_space<vmem>>, %arg7: memref<1x384xf32, #tpu.memory_space<vmem>>, %arg8: memref<384x128xbf16, #tpu.memory_space<vmem>>, %arg9: memref<1x128xf32, #tpu.memory_space<vmem>>, %arg10: memref<8x128xf32, #tpu.memory_space<vmem>>) attributes {dimension_semantics = [#tpu.dimension_semantics<parallel>], iteration_bounds = array<i64: 1>, scalar_prefetch = 0 : i64, scratch_operands = 0 : i64, tpu.core_type = #tpu.core_type<tc>, window_params = [{transform_indices = @transform_0, window_bounds = array<i64: 8, 64>}, {pipeline_mode = #tpu.pipeline_mode<synchronous>, transform_indices = @transform_1, window_bounds = array<i64: 64, 512>}, {pipeline_mode = #tpu.pipeline_mode<synchronous>, transform_indices = @transform_2, window_bounds = array<i64: 1, 512>}, {pipeline_mode = #tpu.pipeline_mode<synchronous>, transform_indices = @transform_3, window_bounds = array<i64: 512, 256>}, {pipeline_mode = #tpu.pipeline_mode<synchronous>, transform_indices = @transform_4, window_bounds = array<i64: 1, 256>}, {pipeline_mode = #tpu.pipeline_mode<synchronous>, transform_indices = @transform_5, window_bounds = array<i64: 256, 384>}, {pipeline_mode = #tpu.pipeline_mode<synchronous>, transform_indices = @transform_6, window_bounds = array<i64: 1, 384>}, {pipeline_mode = #tpu.pipeline_mode<synchronous>, transform_indices = @transform_7, window_bounds = array<i64: 384, 128>}, {pipeline_mode = #tpu.pipeline_mode<synchronous>, transform_indices = @transform_8, window_bounds = array<i64: 1, 128>}, {transform_indices = @transform_9, window_bounds = array<i64: 8, 128>}]} {
    %c0 = arith.constant 0 : index
    %c0_0 = arith.constant 0 : index
    %0 = vector.load %arg1[%c0, %c0_0] : memref<8x64xf32, #tpu.memory_space<vmem>>, vector<8x64xf32>
    %1 = arith.truncf %0 : vector<8x64xf32> to vector<8x64xbf16>
    %c0_1 = arith.constant 0 : index
    %c0_2 = arith.constant 0 : index
    %2 = vector.load %arg2[%c0_1, %c0_2] : memref<64x512xbf16, #tpu.memory_space<vmem>>, vector<64x512xbf16>
    %cst = arith.constant dense<0.000000e+00> : vector<8x512xf32>
    %3 = tpu.matmul %1, %2, %cst {dimension_numbers = #tpu.dot_dimension_numbers<[1], [0], [0], [1], [0, 0, 1, 1], [], []>} : vector<8x64xbf16>, vector<64x512xbf16>, vector<8x512xf32> -> vector<8x512xf32>
    %c0_3 = arith.constant 0 : index
    %c0_4 = arith.constant 0 : index
    %4 = vector.load %arg3[%c0_3, %c0_4] : memref<1x512xf32, #tpu.memory_space<vmem>>, vector<1x512xf32>
    %5 = vector.broadcast %4 : vector<1x512xf32> to vector<8x512xf32>
    %6 = arith.addf %3, %5 : vector<8x512xf32>
    %cst_5 = arith.constant 0.000000e+00 : f32
    %7 = vector.broadcast %cst_5 : f32 to vector<8x512xf32>
    %8 = arith.maximumf %6, %7 : vector<8x512xf32>
    %9 = arith.truncf %8 : vector<8x512xf32> to vector<8x512xbf16>
    %c0_6 = arith.constant 0 : index
    %c0_7 = arith.constant 0 : index
    %10 = vector.load %arg4[%c0_6, %c0_7] : memref<512x256xbf16, #tpu.memory_space<vmem>>, vector<512x256xbf16>
    %cst_8 = arith.constant dense<0.000000e+00> : vector<8x256xf32>
    %11 = tpu.matmul %9, %10, %cst_8 {dimension_numbers = #tpu.dot_dimension_numbers<[1], [0], [0], [1], [0, 0, 1, 1], [], []>} : vector<8x512xbf16>, vector<512x256xbf16>, vector<8x256xf32> -> vector<8x256xf32>
    %c0_9 = arith.constant 0 : index
    %c0_10 = arith.constant 0 : index
    %12 = vector.load %arg5[%c0_9, %c0_10] : memref<1x256xf32, #tpu.memory_space<vmem>>, vector<1x256xf32>
    %13 = vector.broadcast %12 : vector<1x256xf32> to vector<8x256xf32>
    %14 = arith.addf %11, %13 : vector<8x256xf32>
    %cst_11 = arith.constant 0.000000e+00 : f32
    %15 = vector.broadcast %cst_11 : f32 to vector<8x256xf32>
    %16 = arith.maximumf %14, %15 : vector<8x256xf32>
    %17 = arith.truncf %16 : vector<8x256xf32> to vector<8x256xbf16>
    %c0_12 = arith.constant 0 : index
    %c0_13 = arith.constant 0 : index
    %18 = vector.load %arg6[%c0_12, %c0_13] : memref<256x384xbf16, #tpu.memory_space<vmem>>, vector<256x384xbf16>
    %cst_14 = arith.constant dense<0.000000e+00> : vector<8x384xf32>
    %19 = tpu.matmul %17, %18, %cst_14 {dimension_numbers = #tpu.dot_dimension_numbers<[1], [0], [0], [1], [0, 0, 1, 1], [], []>} : vector<8x256xbf16>, vector<256x384xbf16>, vector<8x384xf32> -> vector<8x384xf32>
    %c0_15 = arith.constant 0 : index
    %c0_16 = arith.constant 0 : index
    %20 = vector.load %arg7[%c0_15, %c0_16] : memref<1x384xf32, #tpu.memory_space<vmem>>, vector<1x384xf32>
    %21 = vector.broadcast %20 : vector<1x384xf32> to vector<8x384xf32>
    %22 = arith.addf %19, %21 : vector<8x384xf32>
    %cst_17 = arith.constant 0.000000e+00 : f32
    %23 = vector.broadcast %cst_17 : f32 to vector<8x384xf32>
    %24 = arith.maximumf %22, %23 : vector<8x384xf32>
    %25 = arith.truncf %24 : vector<8x384xf32> to vector<8x384xbf16>
    %c0_18 = arith.constant 0 : index
    %c0_19 = arith.constant 0 : index
    %26 = vector.load %arg8[%c0_18, %c0_19] : memref<384x128xbf16, #tpu.memory_space<vmem>>, vector<384x128xbf16>
    %cst_20 = arith.constant dense<0.000000e+00> : vector<8x128xf32>
    %27 = tpu.matmul %25, %26, %cst_20 {dimension_numbers = #tpu.dot_dimension_numbers<[1], [0], [0], [1], [0, 0, 1, 1], [], []>} : vector<8x384xbf16>, vector<384x128xbf16>, vector<8x128xf32> -> vector<8x128xf32>
    %c0_21 = arith.constant 0 : index
    %c0_22 = arith.constant 0 : index
    %28 = vector.load %arg9[%c0_21, %c0_22] : memref<1x128xf32, #tpu.memory_space<vmem>>, vector<1x128xf32>
    %29 = vector.broadcast %28 : vector<1x128xf32> to vector<8x128xf32>
    %30 = arith.addf %27, %29 : vector<8x128xf32>
    %cst_23 = arith.constant 0.000000e+00 : f32
    %31 = vector.broadcast %cst_23 : f32 to vector<8x128xf32>
    %32 = arith.maximumf %30, %31 : vector<8x128xf32>
    %33 = vector.extract_strided_slice %32 {offsets = [0, 126], sizes = [8, 1], strides = [1, 1]} : vector<8x128xf32> to vector<8x1xf32>
    %cst_24 = arith.constant dense<0.000000e+00> : vector<8xf32>
    %34 = vector.multi_reduction <add>, %32, %cst_24 [1] : vector<8x128xf32> to vector<8xf32>
    %35 = vector.shape_cast %34 : vector<8xf32> to vector<8x1xf32>
    %36 = arith.subf %35, %33 : vector<8x1xf32>
    %37 = vector.broadcast %33 : vector<8x1xf32> to vector<8x128xf32>
    %38 = arith.addf %32, %37 : vector<8x128xf32>
    %39 = tpu.iota {dimensions = array<i32: 1>} : vector<8x128xi32>
    %c127_i32 = arith.constant 127 : i32
    %40 = vector.broadcast %c127_i32 : i32 to vector<8x128xi32>
    %41 = arith.cmpi eq, %39, %40 : vector<8x128xi32>
    %42 = vector.shape_cast %36 : vector<8x1xf32> to vector<8x1xf32>
    %43 = vector.broadcast %42 : vector<8x1xf32> to vector<8x128xf32>
    %44 = arith.select %41, %43, %38 : vector<8x128xi1>, vector<8x128xf32>
    %c0_25 = arith.constant 0 : index
    %c0_26 = arith.constant 0 : index
    %45 = vector.load %arg10[%c0_25, %c0_26] : memref<8x128xf32, #tpu.memory_space<vmem>>, vector<8x128xf32>
    tpu.vector_store %arg10[%c0_25, %c0_26], %44 {strides = array<i32>} : memref<8x128xf32, #tpu.memory_space<vmem>>, vector<8x128xf32>,
    return
  }
  func.func @transform_0(%arg0: i32) -> (i32, i32) {
    %c0_i32 = arith.constant 0 : i32
    %c0_i32_0 = arith.constant 0 : i32
    return %arg0, %c0_i32 : i32, i32
  }
  func.func @transform_1(%arg0: i32) -> (i32, i32) {
    %c0_i32 = arith.constant 0 : i32
    %c0_i32_0 = arith.constant 0 : i32
    %c0_i32_1 = arith.constant 0 : i32
    return %c0_i32, %c0_i32_0 : i32, i32
  }
  func.func @transform_2(%arg0: i32) -> (i32, i32) {
    %c0_i32 = arith.constant 0 : i32
    %c0_i32_0 = arith.constant 0 : i32
    %c0_i32_1 = arith.constant 0 : i32
    return %c0_i32, %c0_i32_0 : i32, i32
  }
  func.func @transform_3(%arg0: i32) -> (i32, i32) {
    %c0_i32 = arith.constant 0 : i32
    %c0_i32_0 = arith.constant 0 : i32
    %c0_i32_1 = arith.constant 0 : i32
    return %c0_i32, %c0_i32_0 : i32, i32
  }
  func.func @transform_4(%arg0: i32) -> (i32, i32) {
    %c0_i32 = arith.constant 0 : i32
    %c0_i32_0 = arith.constant 0 : i32
    %c0_i32_1 = arith.constant 0 : i32
    return %c0_i32, %c0_i32_0 : i32, i32
  }
  func.func @transform_5(%arg0: i32) -> (i32, i32) {
    %c0_i32 = arith.constant 0 : i32
    %c0_i32_0 = arith.constant 0 : i32
    %c0_i32_1 = arith.constant 0 : i32
    return %c0_i32, %c0_i32_0 : i32, i32
  }
  func.func @transform_6(%arg0: i32) -> (i32, i32) {
    %c0_i32 = arith.constant 0 : i32
    %c0_i32_0 = arith.constant 0 : i32
    %c0_i32_1 = arith.constant 0 : i32
    return %c0_i32, %c0_i32_0 : i32, i32
  }
  func.func @transform_7(%arg0: i32) -> (i32, i32) {
    %c0_i32 = arith.constant 0 : i32
    %c0_i32_0 = arith.constant 0 : i32
    %c0_i32_1 = arith.constant 0 : i32
    return %c0_i32, %c0_i32_0 : i32, i32
  }
  func.func @transform_8(%arg0: i32) -> (i32, i32) {
    %c0_i32 = arith.constant 0 : i32
    %c0_i32_0 = arith.constant 0 : i32
    %c0_i32_1 = arith.constant 0 : i32
    return %c0_i32, %c0_i32_0 : i32, i32
  }
  func.func @transform_9(%arg0: i32) -> (i32, i32) {
    %c0_i32 = arith.constant 0 : i32
    %c0_i32_0 = arith.constant 0 : i32
    return %arg0, %c0_i32 : i32, i32
  }
}

</mosaic_0001>

<llo_original>
// kernel: tpu_custom_call.1
$region0: #{tpu_custom_call.1}
  #allocation0 [shape = 'u32[]', space=smem, size = 0x4, offset = 0x4, fixed_abs, tag = 'smem constant byte address 0x4 - core index']
  #allocation1 [shape = 'u32[144,128]{1,0:T(1,128)}', space=vmem, size = 0x12000, scoped, tag = 'internal scratch']
  %s0 = inlined_call_operand.hbm [shape: f32[8,64], index: 0, kind: input, shape index: {}]
  %s1 = inlined_call_operand.hbm [shape: bf16[64,512], index: 1, kind: input, shape index: {}]
  %s2 = inlined_call_operand.vmem [shape: f32[1,512], index: 2, kind: input, shape index: {}]
  %s3 = inlined_call_operand.hbm [shape: bf16[512,256], index: 3, kind: input, shape index: {}]
  %s4 = inlined_call_operand.vmem [shape: f32[1,256], index: 4, kind: input, shape index: {}]
  %s5 = inlined_call_operand.hbm [shape: bf16[256,384], index: 5, kind: input, shape index: {}]
  %s6 = inlined_call_operand.vmem [shape: f32[1,384], index: 6, kind: input, shape index: {}]
  %s7 = inlined_call_operand.hbm [shape: bf16[384,128], index: 7, kind: input, shape index: {}]
  %s8 = inlined_call_operand.vmem [shape: f32[1,128], index: 8, kind: input, shape index: {}]
  %s9 = inlined_call_operand.hbm [shape: f32[8,128], index: 9, kind: output, shape index: {}]
  %s10 = sld [smem:[#allocation0]]
  $region66: #{tpu_custom_call.1} parent=0
    _
  %s12 = ssub.s32 1, %s10
  %s13 = scalar_select 0, %s12, %s10
  $region1: #{tpu_custom_call.1} parent=0
    #allocation2 [shape = 'u8[4096]{0}', space=vmem, size = 0x1000, scoped, tag = 'input window, operand 0, single buffered']
    #allocation3 [shape = 's32[1]{0}', space=sflag, size = 0x4, scoped, tag = 'scoped memory for tpu_custom_call.1']
    #allocation4 [shape = 's32[1]{0}', space=sflag, size = 0x4, scoped, tag = 'scoped memory for tpu_custom_call.1']
    #allocation5 [shape = 'u8[65536]{0}', space=vmem, size = 0x10000, scoped, tag = 'input window, operand 1, single buffered']
    #allocation6 [shape = 's32[1]{0}', space=sflag, size = 0x4, scoped, tag = 'scoped memory for tpu_custom_call.1']
    #allocation7 [shape = 'u8[262144]{0}', space=vmem, size = 0x40000, scoped, tag = 'input window, operand 3, single buffered']
    #allocation8 [shape = 'u8[196608]{0}', space=vmem, size = 0x30000, scoped, tag = 'input window, operand 5, single buffered']
    #allocation9 [shape = 's32[1]{0}', space=sflag, size = 0x4, scoped, tag = 'scoped memory for tpu_custom_call.1']
    #allocation10 [shape = 'u8[98304]{0}', space=vmem, size = 0x18000, scoped, tag = 'input window, operand 7, single buffered']
    #allocation11 [shape = 'u8[4096]{0}', space=vmem, size = 0x1000, scoped, tag = 'output window, operand 0, single buffered']
    %14 = vsyncpa [#allocation3], 0
    %15 = vsyncpa [#allocation6], 0
    %16 = vsyncpa [#allocation9], 0
    %17 = vsyncpa [#allocation4], 0
    // Predicated region
    $region2: #{tpu_custom_call.1} parent=1 // pred_check
      _
    $region3: #{tpu_custom_call.1} parent=1 // pred_check_branch
      %19 = sbr.rel (0) target = $region5
    $region4: #{tpu_custom_call.1} parent=1 // pred_region
      %s21 = ssub.s32 128, 128
      %22 = vsyncadd [#allocation3], %s21
      %s24 = sshll.u32 [#allocation2], 4
      %s25 = int_to_ptr.vmem [resolvable:$true] %s24
      %27 = dma.hbm_to_vmem [thread:$0]  %s0, 128, %s25, [#allocation3]
    $region5: #{tpu_custom_call.1} parent=1 // pred_fallthru
      _
    // Predicated region
    $region6: #{tpu_custom_call.1} parent=1 // pred_check
      _
    $region7: #{tpu_custom_call.1} parent=1 // pred_check_branch
      %29 = sbr.rel (0) target = $region9
    $region8: #{tpu_custom_call.1} parent=1 // pred_region
      %s31 = ssub.s32 2048, 2048
      %32 = vsyncadd [#allocation6], %s31
      %s33 = sshll.u32 [#allocation5], 4
      %s34 = int_to_ptr.vmem [resolvable:$true] %s33
      %39 = dma.hbm_to_vmem [thread:$0]  %s1, 2048, %s34, [#allocation6], 256, 256, 16
    $region9: #{tpu_custom_call.1} parent=1 // pred_fallthru
      _
    // Predicated region
    $region10: #{tpu_custom_call.1} parent=1 // pred_check
      _
    $region11: #{tpu_custom_call.1} parent=1 // pred_check_branch
      %41 = sbr.rel (0) target = $region13
    $region12: #{tpu_custom_call.1} parent=1 // pred_region
      _
    $region13: #{tpu_custom_call.1} parent=1 // pred_fallthru
      _
    // Predicated region
    $region14: #{tpu_custom_call.1} parent=1 // pred_check
      _
    $region15: #{tpu_custom_call.1} parent=1 // pred_check_branch
      %43 = sbr.rel (0) target = $region17
    $region16: #{tpu_custom_call.1} parent=1 // pred_region
      %s45 = ssub.s32 8192, 8192
      %46 = vsyncadd [#allocation6], %s45
      %s47 = sshll.u32 [#allocation7], 4
      %s48 = int_to_ptr.vmem [resolvable:$true] %s47
      %53 = dma.hbm_to_vmem [thread:$0]  %s3, 8192, %s48, [#allocation6], 128, 128, 8
    $region17: #{tpu_custom_call.1} parent=1 // pred_fallthru
      _
    // Predicated region
    $region18: #{tpu_custom_call.1} parent=1 // pred_check
      _
    $region19: #{tpu_custom_call.1} parent=1 // pred_check_branch
      %55 = sbr.rel (0) target = $region21
    $region20: #{tpu_custom_call.1} parent=1 // pred_region
      _
    $region21: #{tpu_custom_call.1} parent=1 // pred_fallthru
      _
    // Predicated region
    $region22: #{tpu_custom_call.1} parent=1 // pred_check
      _
    $region23: #{tpu_custom_call.1} parent=1 // pred_check_branch
      %57 = sbr.rel (0) target = $region25
    $region24: #{tpu_custom_call.1} parent=1 // pred_region
      %s59 = ssub.s32 6144, 6144
      %60 = vsyncadd [#allocation9], %s59
      %s61 = sshll.u32 [#allocation8], 4
      %s62 = int_to_ptr.vmem [resolvable:$true] %s61
      %67 = dma.hbm_to_vmem [thread:$0]  %s5, 6144, %s62, [#allocation9], 192, 192, 12
    $region25: #{tpu_custom_call.1} parent=1 // pred_fallthru
      _
    // Predicated region
    $region26: #{tpu_custom_call.1} parent=1 // pred_check
      _
    $region27: #{tpu_custom_call.1} parent=1 // pred_check_branch
      %69 = sbr.rel (0) target = $region29
    $region28: #{tpu_custom_call.1} parent=1 // pred_region
      _
    $region29: #{tpu_custom_call.1} parent=1 // pred_fallthru
      _
    // Predicated region
    $region30: #{tpu_custom_call.1} parent=1 // pred_check
      _
    $region31: #{tpu_custom_call.1} parent=1 // pred_check_branch
      %71 = sbr.rel (0) target = $region33
    $region32: #{tpu_custom_call.1} parent=1 // pred_region
      %s73 = ssub.s32 3072, 3072
      %74 = vsyncadd [#allocation9], %s73
      %s75 = sshll.u32 [#allocation10], 4
      %s76 = int_to_ptr.vmem [resolvable:$true] %s75
      %81 = dma.hbm_to_vmem [thread:$0]  %s7, 3072, %s76, [#allocation9], 64, 64, 4
    $region33: #{tpu_custom_call.1} parent=1 // pred_fallthru
      _
    // Predicated region
    $region34: #{tpu_custom_call.1} parent=1 // pred_check
      _
    $region35: #{tpu_custom_call.1} parent=1 // pred_check_branch
      %83 = sbr.rel (0) target = $region37
    $region36: #{tpu_custom_call.1} parent=1 // pred_region
      _
    $region37: #{tpu_custom_call.1} parent=1 // pred_fallthru
      _
    // Predicated region
    $region38: #{tpu_custom_call.1} parent=1 // pred_check
      _
    $region39: #{tpu_custom_call.1} parent=1 // pred_check_branch
      %85 = sbr.rel (0) target = $region41
    $region40: #{tpu_custom_call.1} parent=1 // pred_region
      %86 = dma.done [#allocation3], 128
    $region41: #{tpu_custom_call.1} parent=1 // pred_fallthru
      _
    // Predicated region
    $region42: #{tpu_custom_call.1} parent=1 // pred_check
      _
    $region43: #{tpu_custom_call.1} parent=1 // pred_check_branch
      %88 = sbr.rel (0) target = $region45
    $region44: #{tpu_custom_call.1} parent=1 // pred_region
      %89 = dma.done [#allocation6], 2048
    $region45: #{tpu_custom_call.1} parent=1 // pred_fallthru
      _
    // Predicated region
    $region46: #{tpu_custom_call.1} parent=1 // pred_check
      _
    $region47: #{tpu_custom_call.1} parent=1 // pred_check_branch
      %91 = sbr.rel (0) target = $region49
    $region48: #{tpu_custom_call.1} parent=1 // pred_region
      %92 = dma.done [#allocation6], 8192
    $region49: #{tpu_custom_call.1} parent=1 // pred_fallthru
      _
    // Predicated region
    $region50: #{tpu_custom_call.1} parent=1 // pred_check
      _
    $region51: #{tpu_custom_call.1} parent=1 // pred_check_branch
      %94 = sbr.rel (0) target = $region53
    $region52: #{tpu_custom_call.1} parent=1 // pred_region
      %95 = dma.done [#allocation9], 6144
    $region53: #{tpu_custom_call.1} parent=1 // pred_fallthru
      _
    // Predicated region
    $region54: #{tpu_custom_call.1} parent=1 // pred_check
      _
    $region55: #{tpu_custom_call.1} parent=1 // pred_check_branch
      %97 = sbr.rel (0) target = $region57
    $region56: #{tpu_custom_call.1} parent=1 // pred_region
      %98 = dma.done [#allocation9], 3072
    $region57: #{tpu_custom_call.1} parent=1 // pred_fallthru
      _
    %v100 = vld [vmem:[#allocation2] sm:$0xff]
    %v101 = vpack.c.bf16 %v100, %v100
    %v102 = vld [vmem:[#allocation5] sm:$0xff]
    %v103 = vld [vmem:[#allocation5 + $0x8] sm:$0xff]
    %v104 = vld [vmem:[#allocation5 + $0x10] sm:$0xff]
    %v105 = vld [vmem:[#allocation5 + $0x18] sm:$0xff]
    %v106 = vld [vmem:[#allocation5 + $0x20] sm:$0xff]
    %v107 = vld [vmem:[#allocation5 + $0x28] sm:$0xff]
    %v108 = vld [vmem:[#allocation5 + $0x30] sm:$0xff]
    %v109 = vld [vmem:[#allocation5 + $0x38] sm:$0xff]
    %v110 = vld [vmem:[#allocation5 + $0x40] sm:$0xff]
    %v111 = vld [vmem:[#allocation5 + $0x48] sm:$0xff]
    %v112 = vld [vmem:[#allocation5 + $0x50] sm:$0xff]
    %v113 = vld [vmem:[#allocation5 + $0x58] sm:$0xff]
    %v114 = vld [vmem:[#allocation5 + $0x60] sm:$0xff]
    %v115 = vld [vmem:[#allocation5 + $0x68] sm:$0xff]
    %v116 = vld [vmem:[#allocation5 + $0x70] sm:$0xff]
    %v117 = vld [vmem:[#allocation5 + $0x78] sm:$0xff]
    %v118 = vld [vmem:[%s2] sm:$0xf]
    %v120 = vlaneseq
    %v121 = vshrl.u32 %v120, 7
    %v122 = vsub.s32 0, %v121
    %v123 = vrot.slane %v118, %v122
    %v124 = vlaneseq
    %v125 = vshrl.u32 %v124, 7
    %v126 = vsub.s32 1, %v125
    %v127 = vrot.slane %v118, %v126
    %v128 = vlaneseq
    %v129 = vshrl.u32 %v128, 7
    %v130 = vsub.s32 2, %v129
    %v131 = vrot.slane %v118, %v130
    %v132 = vlaneseq
    %v133 = vshrl.u32 %v132, 7
    %v134 = vsub.s32 3, %v133
    %v135 = vrot.slane %v118, %v134
    %v156 = vunpack.c.l.b16 %v102
    %v157 = vunpack.c.h.b16 %v102
    %v158 = vunpack.c.l.b16 %v103
    %v159 = vunpack.c.h.b16 %v103
    %v160 = vunpack.c.l.b16 %v104
    %v161 = vunpack.c.h.b16 %v104
    %v162 = vunpack.c.l.b16 %v105
    %v163 = vunpack.c.h.b16 %v105
    %v164 = vunpack.c.l.b16 %v106
    %v165 = vunpack.c.h.b16 %v106
    %v166 = vunpack.c.l.b16 %v107
    %v167 = vunpack.c.h.b16 %v107
    %v168 = vunpack.c.l.b16 %v108
    %v169 = vunpack.c.h.b16 %v108
    %v170 = vunpack.c.l.b16 %v109
    %v171 = vunpack.c.h.b16 %v109
    %v172 = vunpack.c.l.b16 %v110
    %v173 = vunpack.c.h.b16 %v110
    %v174 = vunpack.c.l.b16 %v111
    %v175 = vunpack.c.h.b16 %v111
    %v176 = vunpack.c.l.b16 %v112
    %v177 = vunpack.c.h.b16 %v112
    %v178 = vunpack.c.l.b16 %v113
    %v179 = vunpack.c.h.b16 %v113
    %v180 = vunpack.c.l.b16 %v114
    %v181 = vunpack.c.h.b16 %v114
    %v182 = vunpack.c.l.b16 %v115
    %v183 = vunpack.c.h.b16 %v115
    %v184 = vunpack.c.l.b16 %v116
    %v185 = vunpack.c.h.b16 %v116
    %v186 = vunpack.c.l.b16 %v117
    %v187 = vunpack.c.h.b16 %v117
    %v188 = vpack.c.b16 %v160, %v156
    %v189 = vpack.c.b16 %v161, %v157
    %v190 = vpack.c.b16 %v162, %v158
    %v191 = vpack.c.b16 %v163, %v159
    %v192 = vpack.c.b16 %v168, %v164
    %v193 = vpack.c.b16 %v169, %v165
    %v194 = vpack.c.b16 %v170, %v166
    %v195 = vpack.c.b16 %v171, %v167
    %v196 = vpack.c.b16 %v176, %v172
    %v197 = vpack.c.b16 %v177, %v173
    %v198 = vpack.c.b16 %v178, %v174
    %v199 = vpack.c.b16 %v179, %v175
    %v200 = vpack.c.b16 %v184, %v180
    %v201 = vpack.c.b16 %v185, %v181
    %v202 = vpack.c.b16 %v186, %v182
    %v203 = vpack.c.b16 %v187, %v183
    %vm220 = vcmask 523264
    %v222 = vsel %vm220, %v101, 0
    %224 = vmatprep.subr.bf16.mxu0 %v189
    %225 = vmatpush1.bf16.msra.mxu0 %v188
    %226 = vmatprep.subr.bf16.mxu0 %v193
    %227 = vmatpush1.bf16.msra.mxu0 %v192
    %228 = vmatprep.subr.bf16.mxu0 %v197
    %229 = vmatpush1.bf16.msra.mxu0 %v196
    %230 = vmatprep.subr.bf16.mxu0 %v201
    %231 = vmatpush1.bf16.msra.mxu0 %v200
    %232 = vmatprep.subr.bf16.mxu0 0
    %233 = vmatpush1.bf16.msra.mxu0 0
    %234 = vmatprep.subr.bf16.mxu0 0
    %235 = vmatpush1.bf16.msra.mxu0 0
    %236 = vmatprep.subr.bf16.mxu0 0
    %237 = vmatpush1.bf16.msra.mxu0 0
    %238 = vmatprep.subr.bf16.mxu0 0
    %239 = vmatpush1.bf16.msra.mxu0 0
    %240 = vmatprep.subr.bf16.mxu0 0
    %241 = vmatpush1.bf16.msra.mxu0 0
    %242 = vmatprep.subr.bf16.mxu0 0
    %243 = vmatpush1.bf16.msra.mxu0 0
    %244 = vmatprep.subr.bf16.mxu0 0
    %245 = vmatpush1.bf16.msra.mxu0 0
    %246 = vmatprep.subr.bf16.mxu0 0
    %247 = vmatpush1.bf16.msra.mxu0 0
    %248 = vmatprep.subr.bf16.mxu0 0
    %249 = vmatpush1.bf16.msra.mxu0 0
    %250 = vmatprep.subr.bf16.mxu0 0
    %251 = vmatpush1.bf16.msra.mxu0 0
    %252 = vmatprep.subr.bf16.mxu0 0
    %253 = vmatpush1.bf16.msra.mxu0 0
    %254 = vmatprep.subr.bf16.mxu0 0
    %255 = vmatpush1.bf16.msra.mxu0 0
    %256 = vmatprep.mubr.bf16.mxu0 0
    %257 = vmatmul.mubr.bf16.gmra.mrb[0].mxu0 %v222
    %v258 = vpop.f32.mrb[0].mxu0
    %v259 = vadd.f32 %v123, %v258
    %v260 = vpop.f32.mrb[0].mxu0
    %v261 = vadd.f32 %v127, %v260
    %v262 = vpop.f32.mrb[0].mxu0
    %v263 = vpop.f32.mrb[0].mxu0
    %264 = vdwg.mxu0
    %265 = vmatprep.subr.bf16.mxu0 %v191
    %266 = vmatpush1.bf16.msra.mxu0 %v190
    %267 = vmatprep.subr.bf16.mxu0 %v195
    %268 = vmatpush1.bf16.msra.mxu0 %v194
    %269 = vmatprep.subr.bf16.mxu0 %v199
    %270 = vmatpush1.bf16.msra.mxu0 %v198
    %271 = vmatprep.subr.bf16.mxu0 %v203
    %272 = vmatpush1.bf16.msra.mxu0 %v202
    %273 = vmatprep.subr.bf16.mxu0 0
    %274 = vmatpush1.bf16.msra.mxu0 0
    %275 = vmatprep.subr.bf16.mxu0 0
    %276 = vmatpush1.bf16.msra.mxu0 0
    %277 = vmatprep.subr.bf16.mxu0 0
    %278 = vmatpush1.bf16.msra.mxu0 0
    %279 = vmatprep.subr.bf16.mxu0 0
    %280 = vmatpush1.bf16.msra.mxu0 0
    %281 = vmatprep.subr.bf16.mxu0 0
    %282 = vmatpush1.bf16.msra.mxu0 0
    %283 = vmatprep.subr.bf16.mxu0 0
    %284 = vmatpush1.bf16.msra.mxu0 0
    %285 = vmatprep.subr.bf16.mxu0 0
    %286 = vmatpush1.bf16.msra.mxu0 0
    %287 = vmatprep.subr.bf16.mxu0 0
    %288 = vmatpush1.bf16.msra.mxu0 0
    %289 = vmatprep.subr.bf16.mxu0 0
    %290 = vmatpush1.bf16.msra.mxu0 0
    %291 = vmatprep.subr.bf16.mxu0 0
    %292 = vmatpush1.bf16.msra.mxu0 0
    %293 = vmatprep.subr.bf16.mxu0 0
    %294 = vmatpush1.bf16.msra.mxu0 0
    %295 = vmatprep.subr.bf16.mxu0 0
    %296 = vmatpush1.bf16.msra.mxu0 0
    %297 = vmatprep.mubr.bf16.mxu0 0
    %298 = vmatmul.mubr.bf16.gmra.mrb[0].mxu0 %v222
    %v299 = vpop.f32.mrb[0].mxu0
    %v300 = vadd.f32 %v131, %v299
    %v301 = vpop.f32.mrb[0].mxu0
    %v302 = vadd.f32 %v135, %v301
    %v303 = vpop.f32.mrb[0].mxu0
    %v304 = vpop.f32.mrb[0].mxu0
    %305 = vdwg.mxu0
    %v306 = vmax.f32 %v259, 0.0
    %v307 = vmax.f32 %v261, 0.0
    %v308 = vmax.f32 %v300, 0.0
    %v309 = vmax.f32 %v302, 0.0
    %v310 = vpack.c.bf16 %v306, %v306
    %v311 = vpack.c.bf16 %v307, %v307
    %v312 = vpack.c.bf16 %v308, %v308
    %v313 = vpack.c.bf16 %v309, %v309
    %v314 = vld [vmem:[#allocation7] sm:$0xff]
    %v315 = vld [vmem:[#allocation7 + $0x8] sm:$0xff]
    %v316 = vld [vmem:[#allocation7 + $0x10] sm:$0xff]
    %v317 = vld [vmem:[#allocation7 + $0x18] sm:$0xff]
    %v318 = vld [vmem:[#allocation7 + $0x20] sm:$0xff]
    %v319 = vld [vmem:[#allocation7 + $0x28] sm:$0xff]
    %v320 = vld [vmem:[#allocation7 + $0x30] sm:$0xff]
    %v321 = vld [vmem:[#allocation7 + $0x38] sm:$0xff]
    %v322 = vld [vmem:[#allocation7 + $0x40] sm:$0xff]
    %v323 = vld [vmem:[#allocation7 + $0x48] sm:$0xff]
    %v324 = vld [vmem:[#allocation7 + $0x50] sm:$0xff]
    %v325 = vld [vmem:[#allocation7 + $0x58] sm:$0xff]
    %v326 = vld [vmem:[#allocation7 + $0x60] sm:$0xff]
    %v327 = vld [vmem:[#allocation7 + $0x68] sm:$0xff]
    %v328 = vld [vmem:[#allocation7 + $0x70] sm:$0xff]
    %v329 = vld [vmem:[#allocation7 + $0x78] sm:$0xff]
    %v330 = vld [vmem:[#allocation7 + $0x80] sm:$0xff]
    %v331 = vld [vmem:[#allocation7 + $0x88] sm:$0xff]
    %v332 = vld [vmem:[#allocation7 + $0x90] sm:$0xff]
    %v333 = vld [vmem:[#allocation7 + $0x98] sm:$0xff]
    %v334 = vld [vmem:[#allocation7 + $0xa0] sm:$0xff]
    %v335 = vld [vmem:[#allocation7 + $0xa8] sm:$0xff]
    %v336 = vld [vmem:[#allocation7 + $0xb0] sm:$0xff]
    %v337 = vld [vmem:[#allocation7 + $0xb8] sm:$0xff]
    %v338 = vld [vmem:[#allocation7 + $0xc0] sm:$0xff]
    %v339 = vld [vmem:[#allocation7 + $0xc8] sm:$0xff]
    %v340 = vld [vmem:[#allocation7 + $0xd0] sm:$0xff]
    %v341 = vld [vmem:[#allocation7 + $0xd8] sm:$0xff]
    %v342 = vld [vmem:[#allocation7 + $0xe0] sm:$0xff]
    %v343 = vld [vmem:[#allocation7 + $0xe8] sm:$0xff]
    %v344 = vld [vmem:[#allocation7 + $0xf0] sm:$0xff]
    %v345 = vld [vmem:[#allocation7 + $0xf8] sm:$0xff]
    %v346 = vld [vmem:[#allocation7 + $0x100] sm:$0xff]
    %v347 = vld [vmem:[#allocation7 + $0x108] sm:$0xff]
    %v348 = vld [vmem:[#allocation7 + $0x110] sm:$0xff]
    %v349 = vld [vmem:[#allocation7 + $0x118] sm:$0xff]
    %v350 = vld [vmem:[#allocation7 + $0x120] sm:$0xff]
    %v351 = vld [vmem:[#allocation7 + $0x128] sm:$0xff]
    %v352 = vld [vmem:[#allocation7 + $0x130] sm:$0xff]
    %v353 = vld [vmem:[#allocation7 + $0x138] sm:$0xff]
    %v354 = vld [vmem:[#allocation7 + $0x140] sm:$0xff]
    %v355 = vld [vmem:[#allocation7 + $0x148] sm:$0xff]
    %v356 = vld [vmem:[#allocation7 + $0x150] sm:$0xff]
    %v357 = vld [vmem:[#allocation7 + $0x158] sm:$0xff]
    %v358 = vld [vmem:[#allocation7 + $0x160] sm:$0xff]
    %v359 = vld [vmem:[#allocation7 + $0x168] sm:$0xff]
    %v360 = vld [vmem:[#allocation7 + $0x170] sm:$0xff]
    %v361 = vld [vmem:[#allocation7 + $0x178] sm:$0xff]
    %v362 = vld [vmem:[#allocation7 + $0x180] sm:$0xff]
    %v363 = vld [vmem:[#allocation7 + $0x188] sm:$0xff]
    %v364 = vld [vmem:[#allocation7 + $0x190] sm:$0xff]
    %v365 = vld [vmem:[#allocation7 + $0x198] sm:$0xff]
    %v366 = vld [vmem:[#allocation7 + $0x1a0] sm:$0xff]
    %v367 = vld [vmem:[#allocation7 + $0x1a8] sm:$0xff]
    %v368 = vld [vmem:[#allocation7 + $0x1b0] sm:$0xff]
    %v369 = vld [vmem:[#allocation7 + $0x1b8] sm:$0xff]
    %v370 = vld [vmem:[#allocation7 + $0x1c0] sm:$0xff]
    %v371 = vld [vmem:[#allocation7 + $0x1c8] sm:$0xff]
    %v372 = vld [vmem:[#allocation7 + $0x1d0] sm:$0xff]
    %v373 = vld [vmem:[#allocation7 + $0x1d8] sm:$0xff]
    %v374 = vld [vmem:[#allocation7 + $0x1e0] sm:$0xff]
    %v375 = vld [vmem:[#allocation7 + $0x1e8] sm:$0xff]
    %v376 = vld [vmem:[#allocation7 + $0x1f0] sm:$0xff]
    %v377 = vld [vmem:[#allocation7 + $0x1f8] sm:$0xff]
    %v378 = vld [vmem:[%s4] sm:$0x3]
    %v380 = vlaneseq
    %v381 = vshrl.u32 %v380, 7
    %v382 = vsub.s32 0, %v381
    %v383 = vrot.slane %v378, %v382
    %v384 = vlaneseq
    %v385 = vshrl.u32 %v384, 7
    %v386 = vsub.s32 1, %v385
    %v387 = vrot.slane %v378, %v386
    %v454 = vunpack.c.l.b16 %v314
    %v455 = vunpack.c.h.b16 %v314
    %v456 = vunpack.c.l.b16 %v315
    %v457 = vunpack.c.h.b16 %v315
    %v458 = vunpack.c.l.b16 %v316
    %v459 = vunpack.c.h.b16 %v316
    %v460 = vunpack.c.l.b16 %v317
    %v461 = vunpack.c.h.b16 %v317
    %v462 = vunpack.c.l.b16 %v318
    %v463 = vunpack.c.h.b16 %v318
    %v464 = vunpack.c.l.b16 %v319
    %v465 = vunpack.c.h.b16 %v319
    %v466 = vunpack.c.l.b16 %v320
    %v467 = vunpack.c.h.b16 %v320
    %v468 = vunpack.c.l.b16 %v321
    %v469 = vunpack.c.h.b16 %v321
    %v470 = vunpack.c.l.b16 %v322
    %v471 = vunpack.c.h.b16 %v322
    %v472 = vunpack.c.l.b16 %v323
    %v473 = vunpack.c.h.b16 %v323
    %v474 = vunpack.c.l.b16 %v324
    %v475 = vunpack.c.h.b16 %v324
    %v476 = vunpack.c.l.b16 %v325
    %v477 = vunpack.c.h.b16 %v325
    %v478 = vunpack.c.l.b16 %v326
    %v479 = vunpack.c.h.b16 %v326
    %v480 = vunpack.c.l.b16 %v327
    %v481 = vunpack.c.h.b16 %v327
    %v482 = vunpack.c.l.b16 %v328
    %v483 = vunpack.c.h.b16 %v328
    %v484 = vunpack.c.l.b16 %v329
    %v485 = vunpack.c.h.b16 %v329
    %v486 = vunpack.c.l.b16 %v330
    %v487 = vunpack.c.h.b16 %v330
    %v488 = vunpack.c.l.b16 %v331
    %v489 = vunpack.c.h.b16 %v331
    %v490 = vunpack.c.l.b16 %v332
    %v491 = vunpack.c.h.b16 %v332
    %v492 = vunpack.c.l.b16 %v333
    %v493 = vunpack.c.h.b16 %v333
    %v494 = vunpack.c.l.b16 %v334
    %v495 = vunpack.c.h.b16 %v334
    %v496 = vunpack.c.l.b16 %v335
    %v497 = vunpack.c.h.b16 %v335
    %v498 = vunpack.c.l.b16 %v336
    %v499 = vunpack.c.h.b16 %v336
    %v500 = vunpack.c.l.b16 %v337
    %v501 = vunpack.c.h.b16 %v337
    %v502 = vunpack.c.l.b16 %v338
    %v503 = vunpack.c.h.b16 %v338
    %v504 = vunpack.c.l.b16 %v339
    %v505 = vunpack.c.h.b16 %v339
    %v506 = vunpack.c.l.b16 %v340
    %v507 = vunpack.c.h.b16 %v340
    %v508 = vunpack.c.l.b16 %v341
    %v509 = vunpack.c.h.b16 %v341
    %v510 = vunpack.c.l.b16 %v342
    %v511 = vunpack.c.h.b16 %v342
    %v512 = vunpack.c.l.b16 %v343
    %v513 = vunpack.c.h.b16 %v343
    %v514 = vunpack.c.l.b16 %v344
    %v515 = vunpack.c.h.b16 %v344
    %v516 = vunpack.c.l.b16 %v345
    %v517 = vunpack.c.h.b16 %v345
    %v518 = vunpack.c.l.b16 %v346
    %v519 = vunpack.c.h.b16 %v346
    %v520 = vunpack.c.l.b16 %v347
    %v521 = vunpack.c.h.b16 %v347
    %v522 = vunpack.c.l.b16 %v348
    %v523 = vunpack.c.h.b16 %v348
    %v524 = vunpack.c.l.b16 %v349
    %v525 = vunpack.c.h.b16 %v349
    %v526 = vunpack.c.l.b16 %v350
    %v527 = vunpack.c.h.b16 %v350
    %v528 = vunpack.c.l.b16 %v351
    %v529 = vunpack.c.h.b16 %v351
    %v530 = vunpack.c.l.b16 %v352
    %v531 = vunpack.c.h.b16 %v352
    %v532 = vunpack.c.l.b16 %v353
    %v533 = vunpack.c.h.b16 %v353
    %v534 = vunpack.c.l.b16 %v354
    %v535 = vunpack.c.h.b16 %v354
    %v536 = vunpack.c.l.b16 %v355
    %v537 = vunpack.c.h.b16 %v355
    %v538 = vunpack.c.l.b16 %v356
    %v539 = vunpack.c.h.b16 %v356
    %v540 = vunpack.c.l.b16 %v357
    %v541 = vunpack.c.h.b16 %v357
    %v542 = vunpack.c.l.b16 %v358
    %v543 = vunpack.c.h.b16 %v358
    %v544 = vunpack.c.l.b16 %v359
    %v545 = vunpack.c.h.b16 %v359
    %v546 = vunpack.c.l.b16 %v360
    %v547 = vunpack.c.h.b16 %v360
    %v548 = vunpack.c.l.b16 %v361
    %v549 = vunpack.c.h.b16 %v361
    %v550 = vunpack.c.l.b16 %v362
    %v551 = vunpack.c.h.b16 %v362
    %v552 = vunpack.c.l.b16 %v363
    %v553 = vunpack.c.h.b16 %v363
    %v554 = vunpack.c.l.b16 %v364
    %v555 = vunpack.c.h.b16 %v364
    %v556 = vunpack.c.l.b16 %v365
    %v557 = vunpack.c.h.b16 %v365
    %v558 = vunpack.c.l.b16 %v366
    %v559 = vunpack.c.h.b16 %v366
    %v560 = vunpack.c.l.b16 %v367
    %v561 = vunpack.c.h.b16 %v367
    %v562 = vunpack.c.l.b16 %v368
    %v563 = vunpack.c.h.b16 %v368
    %v564 = vunpack.c.l.b16 %v369
    %v565 = vunpack.c.h.b16 %v369
    %v566 = vunpack.c.l.b16 %v370
    %v567 = vunpack.c.h.b16 %v370
    %v568 = vunpack.c.l.b16 %v371
    %v569 = vunpack.c.h.b16 %v371
    %v570 = vunpack.c.l.b16 %v372
    %v571 = vunpack.c.h.b16 %v372
    %v572 = vunpack.c.l.b16 %v373
    %v573 = vunpack.c.h.b16 %v373
    %v574 = vunpack.c.l.b16 %v374
    %v575 = vunpack.c.h.b16 %v374
    %v576 = vunpack.c.l.b16 %v375
    %v577 = vunpack.c.h.b16 %v375
    %v578 = vunpack.c.l.b16 %v376
    %v579 = vunpack.c.h.b16 %v376
    %v580 = vunpack.c.l.b16 %v377
    %v581 = vunpack.c.h.b16 %v377
    %v582 = vpack.c.b16 %v456, %v454
    %v583 = vpack.c.b16 %v457, %v455
    %v584 = vpack.c.b16 %v460, %v458
    %v585 = vpack.c.b16 %v461, %v459
    %v586 = vpack.c.b16 %v464, %v462
    %v587 = vpack.c.b16 %v465, %v463
    %v588 = vpack.c.b16 %v468, %v466
    %v589 = vpack.c.b16 %v469, %v467
    %v590 = vpack.c.b16 %v472, %v470
    %v591 = vpack.c.b16 %v473, %v471
    %v592 = vpack.c.b16 %v476, %v474
    %v593 = vpack.c.b16 %v477, %v475
    %v594 = vpack.c.b16 %v480, %v478
    %v595 = vpack.c.b16 %v481, %v479
    %v596 = vpack.c.b16 %v484, %v482
    %v597 = vpack.c.b16 %v485, %v483
    %v598 = vpack.c.b16 %v488, %v486
    %v599 = vpack.c.b16 %v489, %v487
    %v600 = vpack.c.b16 %v492, %v490
    %v601 = vpack.c.b16 %v493, %v491
    %v602 = vpack.c.b16 %v496, %v494
    %v603 = vpack.c.b16 %v497, %v495
    %v604 = vpack.c.b16 %v500, %v498
    %v605 = vpack.c.b16 %v501, %v499
    %v606 = vpack.c.b16 %v504, %v502
    %v607 = vpack.c.b16 %v505, %v503
    %v608 = vpack.c.b16 %v508, %v506
    %v609 = vpack.c.b16 %v509, %v507
    %v610 = vpack.c.b16 %v512, %v510
    %v611 = vpack.c.b16 %v513, %v511
    %v612 = vpack.c.b16 %v516, %v514
    %v613 = vpack.c.b16 %v517, %v515
    %v614 = vpack.c.b16 %v520, %v518
    %v615 = vpack.c.b16 %v521, %v519
    %v616 = vpack.c.b16 %v524, %v522
    %v617 = vpack.c.b16 %v525, %v523
    %v618 = vpack.c.b16 %v528, %v526
    %v619 = vpack.c.b16 %v529, %v527
    %v620 = vpack.c.b16 %v532, %v530
    %v621 = vpack.c.b16 %v533, %v531
    %v622 = vpack.c.b16 %v536, %v534
    %v623 = vpack.c.b16 %v537, %v535
    %v624 = vpack.c.b16 %v540, %v538
    %v625 = vpack.c.b16 %v541, %v539
    %v626 = vpack.c.b16 %v544, %v542
    %v627 = vpack.c.b16 %v545, %v543
    %v628 = vpack.c.b16 %v548, %v546
    %v629 = vpack.c.b16 %v549, %v547
    %v630 = vpack.c.b16 %v552, %v550
    %v631 = vpack.c.b16 %v553, %v551
    %v632 = vpack.c.b16 %v556, %v554
    %v633 = vpack.c.b16 %v557, %v555
    %v634 = vpack.c.b16 %v560, %v558
    %v635 = vpack.c.b16 %v561, %v559
    %v636 = vpack.c.b16 %v564, %v562
    %v637 = vpack.c.b16 %v565, %v563
    %v638 = vpack.c.b16 %v568, %v566
    %v639 = vpack.c.b16 %v569, %v567
    %v640 = vpack.c.b16 %v572, %v570
    %v641 = vpack.c.b16 %v573, %v571
    %v642 = vpack.c.b16 %v576, %v574
    %v643 = vpack.c.b16 %v577, %v575
    %v644 = vpack.c.b16 %v580, %v578
    %v645 = vpack.c.b16 %v581, %v579
    %710 = vmatprep.subr.bf16.mxu0 %v583
    %711 = vmatpush1.bf16.msra.mxu0 %v582
    %712 = vmatprep.subr.bf16.mxu0 %v585
    %713 = vmatpush1.bf16.msra.mxu0 %v584
    %714 = vmatprep.subr.bf16.mxu0 %v587
    %715 = vmatpush1.bf16.msra.mxu0 %v586
    %716 = vmatprep.subr.bf16.mxu0 %v589
    %717 = vmatpush1.bf16.msra.mxu0 %v588
    %718 = vmatprep.subr.bf16.mxu0 %v591
    %719 = vmatpush1.bf16.msra.mxu0 %v590
    %720 = vmatprep.subr.bf16.mxu0 %v593
    %721 = vmatpush1.bf16.msra.mxu0 %v592
    %722 = vmatprep.subr.bf16.mxu0 %v595
    %723 = vmatpush1.bf16.msra.mxu0 %v594
    %724 = vmatprep.subr.bf16.mxu0 %v597
    %725 = vmatpush1.bf16.msra.mxu0 %v596
    %726 = vmatprep.subr.bf16.mxu0 %v599
    %727 = vmatpush1.bf16.msra.mxu0 %v598
    %728 = vmatprep.subr.bf16.mxu0 %v601
    %729 = vmatpush1.bf16.msra.mxu0 %v600
    %730 = vmatprep.subr.bf16.mxu0 %v603
    %731 = vmatpush1.bf16.msra.mxu0 %v602
    %732 = vmatprep.subr.bf16.mxu0 %v605
    %733 = vmatpush1.bf16.msra.mxu0 %v604
    %734 = vmatprep.subr.bf16.mxu0 %v607
    %735 = vmatpush1.bf16.msra.mxu0 %v606
    %736 = vmatprep.subr.bf16.mxu0 %v609
    %737 = vmatpush1.bf16.msra.mxu0 %v608
    %738 = vmatprep.subr.bf16.mxu0 %v611
    %739 = vmatpush1.bf16.msra.mxu0 %v610
    %740 = vmatprep.subr.bf16.mxu0 %v613
    %741 = vmatpush1.bf16.msra.mxu0 %v612
    %742 = vmatprep.mubr.bf16.mxu0 %v311
    %743 = vmatmul.mubr.bf16.gmra.mrb[0].mxu0 %v310
    %v744 = vpop.f32.mrb[0].mxu0
    %v745 = vadd.f32 %v383, %v744
    %v746 = vpop.f32.mrb[0].mxu0
    %v747 = vadd.f32 %v387, %v746
    %v748 = vpop.f32.mrb[0].mxu0
    %v749 = vpop.f32.mrb[0].mxu0
    %750 = vdwg.mxu0
    %751 = vmatprep.subr.bf16.mxu0 %v615
    %752 = vmatpush1.bf16.msra.mxu0 %v614
    %753 = vmatprep.subr.bf16.mxu0 %v617
    %754 = vmatpush1.bf16.msra.mxu0 %v616
    %755 = vmatprep.subr.bf16.mxu0 %v619
    %756 = vmatpush1.bf16.msra.mxu0 %v618
    %757 = vmatprep.subr.bf16.mxu0 %v621
    %758 = vmatpush1.bf16.msra.mxu0 %v620
    %759 = vmatprep.subr.bf16.mxu0 %v623
    %760 = vmatpush1.bf16.msra.mxu0 %v622
    %761 = vmatprep.subr.bf16.mxu0 %v625
    %762 = vmatpush1.bf16.msra.mxu0 %v624
    %763 = vmatprep.subr.bf16.mxu0 %v627
    %764 = vmatpush1.bf16.msra.mxu0 %v626
    %765 = vmatprep.subr.bf16.mxu0 %v629
    %766 = vmatpush1.bf16.msra.mxu0 %v628
    %767 = vmatprep.subr.bf16.mxu0 %v631
    %768 = vmatpush1.bf16.msra.mxu0 %v630
    %769 = vmatprep.subr.bf16.mxu0 %v633
    %770 = vmatpush1.bf16.msra.mxu0 %v632
    %771 = vmatprep.subr.bf16.mxu0 %v635
    %772 = vmatpush1.bf16.msra.mxu0 %v634
    %773 = vmatprep.subr.bf16.mxu0 %v637
    %774 = vmatpush1.bf16.msra.mxu0 %v636
    %775 = vmatprep.subr.bf16.mxu0 %v639
    %776 = vmatpush1.bf16.msra.mxu0 %v638
    %777 = vmatprep.subr.bf16.mxu0 %v641
    %778 = vmatpush1.bf16.msra.mxu0 %v640
    %779 = vmatprep.subr.bf16.mxu0 %v643
    %780 = vmatpush1.bf16.msra.mxu0 %v642
    %781 = vmatprep.subr.bf16.mxu0 %v645
    %782 = vmatpush1.bf16.msra.mxu0 %v644
    %783 = vmatprep.mubr.bf16.mxu0 %v313
    %784 = vmatmul.mubr.bf16.gmra.mrb[0].mxu0 %v312
    %v785 = vpop.f32.mrb[0].mxu0
    %v786 = vadd.f32 %v745, %v785
    %v787 = vpop.f32.mrb[0].mxu0
    %v788 = vadd.f32 %v747, %v787
    %v789 = vpop.f32.mrb[0].mxu0
    %v790 = vpop.f32.mrb[0].mxu0
    %791 = vdwg.mxu0
    %v792 = vmax.f32 %v786, 0.0
    %v793 = vmax.f32 %v788, 0.0
    %v794 = vpack.c.bf16 %v792, %v792
    %v795 = vpack.c.bf16 %v793, %v793
    %v796 = vld [vmem:[#allocation8] sm:$0xff]
    %v797 = vld [vmem:[#allocation8 + $0x8] sm:$0xf]
    %v798 = vld [vmem:[#allocation8 + $0xc] sm:$0xff]
    %v799 = vld [vmem:[#allocation8 + $0x14] sm:$0xf]
    %v800 = vld [vmem:[#allocation8 + $0x18] sm:$0xff]
    %v801 = vld [vmem:[#allocation8 + $0x20] sm:$0xf]
    %v802 = vld [vmem:[#allocation8 + $0x24] sm:$0xff]
    %v803 = vld [vmem:[#allocation8 + $0x2c] sm:$0xf]
    %v804 = vld [vmem:[#allocation8 + $0x30] sm:$0xff]
    %v805 = vld [vmem:[#allocation8 + $0x38] sm:$0xf]
    %v806 = vld [vmem:[#allocation8 + $0x3c] sm:$0xff]
    %v807 = vld [vmem:[#allocation8 + $0x44] sm:$0xf]
    %v808 = vld [vmem:[#allocation8 + $0x48] sm:$0xff]
    %v809 = vld [vmem:[#allocation8 + $0x50] sm:$0xf]
    %v810 = vld [vmem:[#allocation8 + $0x54] sm:$0xff]
    %v811 = vld [vmem:[#allocation8 + $0x5c] sm:$0xf]
    %v812 = vld [vmem:[#allocation8 + $0x60] sm:$0xff]
    %v813 = vld [vmem:[#allocation8 + $0x68] sm:$0xf]
    %v814 = vld [vmem:[#allocation8 + $0x6c] sm:$0xff]
    %v815 = vld [vmem:[#allocation8 + $0x74] sm:$0xf]
    %v816 = vld [vmem:[#allocation8 + $0x78] sm:$0xff]
    %v817 = vld [vmem:[#allocation8 + $0x80] sm:$0xf]
    %v818 = vld [vmem:[#allocation8 + $0x84] sm:$0xff]
    %v819 = vld [vmem:[#allocation8 + $0x8c] sm:$0xf]
    %v820 = vld [vmem:[#allocation8 + $0x90] sm:$0xff]
    %v821 = vld [vmem:[#allocation8 + $0x98] sm:$0xf]
    %v822 = vld [vmem:[#allocation8 + $0x9c] sm:$0xff]
    %v823 = vld [vmem:[#allocation8 + $0xa4] sm:$0xf]
    %v824 = vld [vmem:[#allocation8 + $0xa8] sm:$0xff]
    %v825 = vld [vmem:[#allocation8 + $0xb0] sm:$0xf]
    %v826 = vld [vmem:[#allocation8 + $0xb4] sm:$0xff]
    %v827 = vld [vmem:[#allocation8 + $0xbc] sm:$0xf]
    %v828 = vld [vmem:[#allocation8 + $0xc0] sm:$0xff]
    %v829 = vld [vmem:[#allocation8 + $0xc8] sm:$0xf]
    %v830 = vld [vmem:[#allocation8 + $0xcc] sm:$0xff]
    %v831 = vld [vmem:[#allocation8 + $0xd4] sm:$0xf]
    %v832 = vld [vmem:[#allocation8 + $0xd8] sm:$0xff]
    %v833 = vld [vmem:[#allocation8 + $0xe0] sm:$0xf]
    %v834 = vld [vmem:[#allocation8 + $0xe4] sm:$0xff]
    %v835 = vld [vmem:[#allocation8 + $0xec] sm:$0xf]
    %v836 = vld [vmem:[#allocation8 + $0xf0] sm:$0xff]
    %v837 = vld [vmem:[#allocation8 + $0xf8] sm:$0xf]
    %v838 = vld [vmem:[#allocation8 + $0xfc] sm:$0xff]
    %v839 = vld [vmem:[#allocation8 + $0x104] sm:$0xf]
    %v840 = vld [vmem:[#allocation8 + $0x108] sm:$0xff]
    %v841 = vld [vmem:[#allocation8 + $0x110] sm:$0xf]
    %v842 = vld [vmem:[#allocation8 + $0x114] sm:$0xff]
    %v843 = vld [vmem:[#allocation8 + $0x11c] sm:$0xf]
    %v844 = vld [vmem:[#allocation8 + $0x120] sm:$0xff]
    %v845 = vld [vmem:[#allocation8 + $0x128] sm:$0xf]
    %v846 = vld [vmem:[#allocation8 + $0x12c] sm:$0xff]
    %v847 = vld [vmem:[#allocation8 + $0x134] sm:$0xf]
    %v848 = vld [vmem:[#allocation8 + $0x138] sm:$0xff]
    %v849 = vld [vmem:[#allocation8 + $0x140] sm:$0xf]
    %v850 = vld [vmem:[#allocation8 + $0x144] sm:$0xff]
    %v851 = vld [vmem:[#allocation8 + $0x14c] sm:$0xf]
    %v852 = vld [vmem:[#allocation8 + $0x150] sm:$0xff]
    %v853 = vld [vmem:[#allocation8 + $0x158] sm:$0xf]
    %v854 = vld [vmem:[#allocation8 + $0x15c] sm:$0xff]
    %v855 = vld [vmem:[#allocation8 + $0x164] sm:$0xf]
    %v856 = vld [vmem:[#allocation8 + $0x168] sm:$0xff]
    %v857 = vld [vmem:[#allocation8 + $0x170] sm:$0xf]
    %v858 = vld [vmem:[#allocation8 + $0x174] sm:$0xff]
    %v859 = vld [vmem:[#allocation8 + $0x17c] sm:$0xf]
    %v860 = vld [vmem:[%s6] sm:$0x7]
    %v862 = vlaneseq
    %v863 = vshrl.u32 %v862, 7
    %v864 = vsub.s32 0, %v863
    %v865 = vrot.slane %v860, %v864
    %v866 = vlaneseq
    %v867 = vshrl.u32 %v866, 7
    %v868 = vsub.s32 1, %v867
    %v869 = vrot.slane %v860, %v868
    %v870 = vlaneseq
    %v871 = vshrl.u32 %v870, 7
    %v872 = vsub.s32 2, %v871
    %v873 = vrot.slane %v860, %v872
    %v941 = vunpack.c.l.b16 %v796
    %v942 = vunpack.c.h.b16 %v796
    %v943 = vunpack.c.l.b16 %v797
    %v944 = vunpack.c.l.b16 %v798
    %v945 = vunpack.c.h.b16 %v798
    %v946 = vunpack.c.l.b16 %v799
    %v947 = vunpack.c.l.b16 %v800
    %v948 = vunpack.c.h.b16 %v800
    %v949 = vunpack.c.l.b16 %v801
    %v950 = vunpack.c.l.b16 %v802
    %v951 = vunpack.c.h.b16 %v802
    %v952 = vunpack.c.l.b16 %v803
    %v953 = vunpack.c.l.b16 %v804
    %v954 = vunpack.c.h.b16 %v804
    %v955 = vunpack.c.l.b16 %v805
    %v956 = vunpack.c.l.b16 %v806
    %v957 = vunpack.c.h.b16 %v806
    %v958 = vunpack.c.l.b16 %v807
    %v959 = vunpack.c.l.b16 %v808
    %v960 = vunpack.c.h.b16 %v808
    %v961 = vunpack.c.l.b16 %v809
    %v962 = vunpack.c.l.b16 %v810
    %v963 = vunpack.c.h.b16 %v810
    %v964 = vunpack.c.l.b16 %v811
    %v965 = vunpack.c.l.b16 %v812
    %v966 = vunpack.c.h.b16 %v812
    %v967 = vunpack.c.l.b16 %v813
    %v968 = vunpack.c.l.b16 %v814
    %v969 = vunpack.c.h.b16 %v814
    %v970 = vunpack.c.l.b16 %v815
    %v971 = vunpack.c.l.b16 %v816
    %v972 = vunpack.c.h.b16 %v816
    %v973 = vunpack.c.l.b16 %v817
    %v974 = vunpack.c.l.b16 %v818
    %v975 = vunpack.c.h.b16 %v818
    %v976 = vunpack.c.l.b16 %v819
    %v977 = vunpack.c.l.b16 %v820
    %v978 = vunpack.c.h.b16 %v820
    %v979 = vunpack.c.l.b16 %v821
    %v980 = vunpack.c.l.b16 %v822
    %v981 = vunpack.c.h.b16 %v822
    %v982 = vunpack.c.l.b16 %v823
    %v983 = vunpack.c.l.b16 %v824
    %v984 = vunpack.c.h.b16 %v824
    %v985 = vunpack.c.l.b16 %v825
    %v986 = vunpack.c.l.b16 %v826
    %v987 = vunpack.c.h.b16 %v826
    %v988 = vunpack.c.l.b16 %v827
    %v989 = vunpack.c.l.b16 %v828
    %v990 = vunpack.c.h.b16 %v828
    %v991 = vunpack.c.l.b16 %v829
    %v992 = vunpack.c.l.b16 %v830
    %v993 = vunpack.c.h.b16 %v830
    %v994 = vunpack.c.l.b16 %v831
    %v995 = vunpack.c.l.b16 %v832
    %v996 = vunpack.c.h.b16 %v832
    %v997 = vunpack.c.l.b16 %v833
    %v998 = vunpack.c.l.b16 %v834
    %v999 = vunpack.c.h.b16 %v834
    %v1000 = vunpack.c.l.b16 %v835
    %v1001 = vunpack.c.l.b16 %v836
    %v1002 = vunpack.c.h.b16 %v836
    %v1003 = vunpack.c.l.b16 %v837
    %v1004 = vunpack.c.l.b16 %v838
    %v1005 = vunpack.c.h.b16 %v838
    %v1006 = vunpack.c.l.b16 %v839
    %v1007 = vunpack.c.l.b16 %v840
    %v1008 = vunpack.c.h.b16 %v840
    %v1009 = vunpack.c.l.b16 %v841
    %v1010 = vunpack.c.l.b16 %v842
    %v1011 = vunpack.c.h.b16 %v842
    %v1012 = vunpack.c.l.b16 %v843
    %v1013 = vunpack.c.l.b16 %v844
    %v1014 = vunpack.c.h.b16 %v844
    %v1015 = vunpack.c.l.b16 %v845
    %v1016 = vunpack.c.l.b16 %v846
    %v1017 = vunpack.c.h.b16 %v846
    %v1018 = vunpack.c.l.b16 %v847
    %v1019 = vunpack.c.l.b16 %v848
    %v1020 = vunpack.c.h.b16 %v848
    %v1021 = vunpack.c.l.b16 %v849
    %v1022 = vunpack.c.l.b16 %v850
    %v1023 = vunpack.c.h.b16 %v850
    %v1024 = vunpack.c.l.b16 %v851
    %v1025 = vunpack.c.l.b16 %v852
    %v1026 = vunpack.c.h.b16 %v852
    %v1027 = vunpack.c.l.b16 %v853
    %v1028 = vunpack.c.l.b16 %v854
    %v1029 = vunpack.c.h.b16 %v854
    %v1030 = vunpack.c.l.b16 %v855
    %v1031 = vunpack.c.l.b16 %v856
    %v1032 = vunpack.c.h.b16 %v856
    %v1033 = vunpack.c.l.b16 %v857
    %v1034 = vunpack.c.l.b16 %v858
    %v1035 = vunpack.c.h.b16 %v858
    %v1036 = vunpack.c.l.b16 %v859
    %v1037 = vpack.c.b16 %v944, %v941
    %v1038 = vpack.c.b16 %v945, %v942
    %v1039 = vpack.c.b16 %v946, %v943
    %v1040 = vpack.c.b16 %v950, %v947
    %v1041 = vpack.c.b16 %v951, %v948
    %v1042 = vpack.c.b16 %v952, %v949
    %v1043 = vpack.c.b16 %v956, %v953
    %v1044 = vpack.c.b16 %v957, %v954
    %v1045 = vpack.c.b16 %v958, %v955
    %v1046 = vpack.c.b16 %v962, %v959
    %v1047 = vpack.c.b16 %v963, %v960
    %v1048 = vpack.c.b16 %v964, %v961
    %v1049 = vpack.c.b16 %v968, %v965
    %v1050 = vpack.c.b16 %v969, %v966
    %v1051 = vpack.c.b16 %v970, %v967
    %v1052 = vpack.c.b16 %v974, %v971
    %v1053 = vpack.c.b16 %v975, %v972
    %v1054 = vpack.c.b16 %v976, %v973
    %v1055 = vpack.c.b16 %v980, %v977
    %v1056 = vpack.c.b16 %v981, %v978
    %v1057 = vpack.c.b16 %v982, %v979
    %v1058 = vpack.c.b16 %v986, %v983
    %v1059 = vpack.c.b16 %v987, %v984
    %v1060 = vpack.c.b16 %v988, %v985
    %v1061 = vpack.c.b16 %v992, %v989
    %v1062 = vpack.c.b16 %v993, %v990
    %v1063 = vpack.c.b16 %v994, %v991
    %v1064 = vpack.c.b16 %v998, %v995
    %v1065 = vpack.c.b16 %v999, %v996
    %v1066 = vpack.c.b16 %v1000, %v997
    %v1067 = vpack.c.b16 %v1004, %v1001
    %v1068 = vpack.c.b16 %v1005, %v1002
    %v1069 = vpack.c.b16 %v1006, %v1003
    %v1070 = vpack.c.b16 %v1010, %v1007
    %v1071 = vpack.c.b16 %v1011, %v1008
    %v1072 = vpack.c.b16 %v1012, %v1009
    %v1073 = vpack.c.b16 %v1016, %v1013
    %v1074 = vpack.c.b16 %v1017, %v1014
    %v1075 = vpack.c.b16 %v1018, %v1015
    %v1076 = vpack.c.b16 %v1022, %v1019
    %v1077 = vpack.c.b16 %v1023, %v1020
    %v1078 = vpack.c.b16 %v1024, %v1021
    %v1079 = vpack.c.b16 %v1028, %v1025
    %v1080 = vpack.c.b16 %v1029, %v1026
    %v1081 = vpack.c.b16 %v1030, %v1027
    %v1082 = vpack.c.b16 %v1034, %v1031
    %v1083 = vpack.c.b16 %v1035, %v1032
    %v1084 = vpack.c.b16 %v1036, %v1033
    %1133 = vmatprep.subr.bf16.mxu0 %v1038
    %1134 = vmatpush1.bf16.msra.mxu0 %v1037
    %1135 = vmatprep.subr.bf16.mxu0 %v1041
    %1136 = vmatpush1.bf16.msra.mxu0 %v1040
    %1137 = vmatprep.subr.bf16.mxu0 %v1044
    %1138 = vmatpush1.bf16.msra.mxu0 %v1043
    %1139 = vmatprep.subr.bf16.mxu0 %v1047
    %1140 = vmatpush1.bf16.msra.mxu0 %v1046
    %1141 = vmatprep.subr.bf16.mxu0 %v1050
    %1142 = vmatpush1.bf16.msra.mxu0 %v1049
    %1143 = vmatprep.subr.bf16.mxu0 %v1053
    %1144 = vmatpush1.bf16.msra.mxu0 %v1052
    %1145 = vmatprep.subr.bf16.mxu0 %v1056
    %1146 = vmatpush1.bf16.msra.mxu0 %v1055
    %1147 = vmatprep.subr.bf16.mxu0 %v1059
    %1148 = vmatpush1.bf16.msra.mxu0 %v1058
    %1149 = vmatprep.subr.bf16.mxu0 %v1062
    %1150 = vmatpush1.bf16.msra.mxu0 %v1061
    %1151 = vmatprep.subr.bf16.mxu0 %v1065
    %1152 = vmatpush1.bf16.msra.mxu0 %v1064
    %1153 = vmatprep.subr.bf16.mxu0 %v1068
    %1154 = vmatpush1.bf16.msra.mxu0 %v1067
    %1155 = vmatprep.subr.bf16.mxu0 %v1071
    %1156 = vmatpush1.bf16.msra.mxu0 %v1070
    %1157 = vmatprep.subr.bf16.mxu0 %v1074
    %1158 = vmatpush1.bf16.msra.mxu0 %v1073
    %1159 = vmatprep.subr.bf16.mxu0 %v1077
    %1160 = vmatpush1.bf16.msra.mxu0 %v1076
    %1161 = vmatprep.subr.bf16.mxu0 %v1080
    %1162 = vmatpush1.bf16.msra.mxu0 %v1079
    %1163 = vmatprep.subr.bf16.mxu0 %v1083
    %1164 = vmatpush1.bf16.msra.mxu0 %v1082
    %1165 = vmatprep.mubr.bf16.mxu0 %v795
    %1166 = vmatmul.mubr.bf16.gmra.mrb[0].mxu0 %v794
    %v1167 = vpop.f32.mrb[0].mxu0
    %v1168 = vadd.f32 %v865, %v1167
    %v1169 = vpop.f32.mrb[0].mxu0
    %v1170 = vadd.f32 %v869, %v1169
    %v1171 = vpop.f32.mrb[0].mxu0
    %v1172 = vpop.f32.mrb[0].mxu0
    %1173 = vdwg.mxu0
    %1174 = vmatprep.subr.bf16.mxu0 0
    %1175 = vmatpush1.bf16.msra.mxu0 %v1039
    %1176 = vmatprep.subr.bf16.mxu0 0
    %1177 = vmatpush1.bf16.msra.mxu0 %v1042
    %1178 = vmatprep.subr.bf16.mxu0 0
    %1179 = vmatpush1.bf16.msra.mxu0 %v1045
    %1180 = vmatprep.subr.bf16.mxu0 0
    %1181 = vmatpush1.bf16.msra.mxu0 %v1048
    %1182 = vmatprep.subr.bf16.mxu0 0
    %1183 = vmatpush1.bf16.msra.mxu0 %v1051
    %1184 = vmatprep.subr.bf16.mxu0 0
    %1185 = vmatpush1.bf16.msra.mxu0 %v1054
    %1186 = vmatprep.subr.bf16.mxu0 0
    %1187 = vmatpush1.bf16.msra.mxu0 %v1057
    %1188 = vmatprep.subr.bf16.mxu0 0
    %1189 = vmatpush1.bf16.msra.mxu0 %v1060
    %1190 = vmatprep.subr.bf16.mxu0 0
    %1191 = vmatpush1.bf16.msra.mxu0 %v1063
    %1192 = vmatprep.subr.bf16.mxu0 0
    %1193 = vmatpush1.bf16.msra.mxu0 %v1066
    %1194 = vmatprep.subr.bf16.mxu0 0
    %1195 = vmatpush1.bf16.msra.mxu0 %v1069
    %1196 = vmatprep.subr.bf16.mxu0 0
    %1197 = vmatpush1.bf16.msra.mxu0 %v1072
    %1198 = vmatprep.subr.bf16.mxu0 0
    %1199 = vmatpush1.bf16.msra.mxu0 %v1075
    %1200 = vmatprep.subr.bf16.mxu0 0
    %1201 = vmatpush1.bf16.msra.mxu0 %v1078
    %1202 = vmatprep.subr.bf16.mxu0 0
    %1203 = vmatpush1.bf16.msra.mxu0 %v1081
    %1204 = vmatprep.subr.bf16.mxu0 0
    %1205 = vmatpush1.bf16.msra.mxu0 %v1084
    %1206 = vmatprep.mubr.bf16.mxu0 %v795
    %1207 = vmatmul.mubr.bf16.gmra.mrb[0].mxu0 %v794
    %v1208 = vpop.f32.mrb[0].mxu0
    %v1209 = vadd.f32 %v873, %v1208
    %v1210 = vpop.f32.mrb[0].mxu0
    %v1211 = vpop.f32.mrb[0].mxu0
    %v1212 = vpop.f32.mrb[0].mxu0
    %1213 = vdwg.mxu0
    %v1214 = vmax.f32 %v1168, 0.0
    %v1215 = vmax.f32 %v1170, 0.0
    %v1216 = vmax.f32 %v1209, 0.0
    %v1217 = vpack.c.bf16 %v1214, %v1214
    %v1218 = vpack.c.bf16 %v1215, %v1215
    %v1219 = vpack.c.bf16 %v1216, %v1216
    %v1220 = vld [vmem:[#allocation10] sm:$0xf]
    %v1221 = vld [vmem:[#allocation10 + $0x4] sm:$0xf]
    %v1222 = vld [vmem:[#allocation10 + $0x8] sm:$0xf]
    %v1223 = vld [vmem:[#allocation10 + $0xc] sm:$0xf]
    %v1224 = vld [vmem:[#allocation10 + $0x10] sm:$0xf]
    %v1225 = vld [vmem:[#allocation10 + $0x14] sm:$0xf]
    %v1226 = vld [vmem:[#allocation10 + $0x18] sm:$0xf]
    %v1227 = vld [vmem:[#allocation10 + $0x1c] sm:$0xf]
    %v1228 = vld [vmem:[#allocation10 + $0x20] sm:$0xf]
    %v1229 = vld [vmem:[#allocation10 + $0x24] sm:$0xf]
    %v1230 = vld [vmem:[#allocation10 + $0x28] sm:$0xf]
    %v1231 = vld [vmem:[#allocation10 + $0x2c] sm:$0xf]
    %v1232 = vld [vmem:[#allocation10 + $0x30] sm:$0xf]
    %v1233 = vld [vmem:[#allocation10 + $0x34] sm:$0xf]
    %v1234 = vld [vmem:[#allocation10 + $0x38] sm:$0xf]
    %v1235 = vld [vmem:[#allocation10 + $0x3c] sm:$0xf]
    %v1236 = vld [vmem:[#allocation10 + $0x40] sm:$0xf]
    %v1237 = vld [vmem:[#allocation10 + $0x44] sm:$0xf]
    %v1238 = vld [vmem:[#allocation10 + $0x48] sm:$0xf]
    %v1239 = vld [vmem:[#allocation10 + $0x4c] sm:$0xf]
    %v1240 = vld [vmem:[#allocation10 + $0x50] sm:$0xf]
    %v1241 = vld [vmem:[#allocation10 + $0x54] sm:$0xf]
    %v1242 = vld [vmem:[#allocation10 + $0x58] sm:$0xf]
    %v1243 = vld [vmem:[#allocation10 + $0x5c] sm:$0xf]
    %v1244 = vld [vmem:[#allocation10 + $0x60] sm:$0xf]
    %v1245 = vld [vmem:[#allocation10 + $0x64] sm:$0xf]
    %v1246 = vld [vmem:[#allocation10 + $0x68] sm:$0xf]
    %v1247 = vld [vmem:[#allocation10 + $0x6c] sm:$0xf]
    %v1248 = vld [vmem:[#allocation10 + $0x70] sm:$0xf]
    %v1249 = vld [vmem:[#allocation10 + $0x74] sm:$0xf]
    %v1250 = vld [vmem:[#allocation10 + $0x78] sm:$0xf]
    %v1251 = vld [vmem:[#allocation10 + $0x7c] sm:$0xf]
    %v1252 = vld [vmem:[#allocation10 + $0x80] sm:$0xf]
    %v1253 = vld [vmem:[#allocation10 + $0x84] sm:$0xf]
    %v1254 = vld [vmem:[#allocation10 + $0x88] sm:$0xf]
    %v1255 = vld [vmem:[#allocation10 + $0x8c] sm:$0xf]
    %v1256 = vld [vmem:[#allocation10 + $0x90] sm:$0xf]
    %v1257 = vld [vmem:[#allocation10 + $0x94] sm:$0xf]
    %v1258 = vld [vmem:[#allocation10 + $0x98] sm:$0xf]
    %v1259 = vld [vmem:[#allocation10 + $0x9c] sm:$0xf]
    %v1260 = vld [vmem:[#allocation10 + $0xa0] sm:$0xf]
    %v1261 = vld [vmem:[#allocation10 + $0xa4] sm:$0xf]
    %v1262 = vld [vmem:[#allocation10 + $0xa8] sm:$0xf]
    %v1263 = vld [vmem:[#allocation10 + $0xac] sm:$0xf]
    %v1264 = vld [vmem:[#allocation10 + $0xb0] sm:$0xf]
    %v1265 = vld [vmem:[#allocation10 + $0xb4] sm:$0xf]
    %v1266 = vld [vmem:[#allocation10 + $0xb8] sm:$0xf]
    %v1267 = vld [vmem:[#allocation10 + $0xbc] sm:$0xf]
    %v1268 = vld [vmem:[%s8] sm:$0x1]
    %v1270 = vlaneseq
    %v1271 = vshrl.u32 %v1270, 7
    %v1272 = vsub.s32 0, %v1271
    %v1273 = vrot.slane %v1268, %v1272
    %v1323 = vunpack.c.l.b16 %v1220
    %v1324 = vunpack.c.l.b16 %v1221
    %v1325 = vunpack.c.l.b16 %v1222
    %v1326 = vunpack.c.l.b16 %v1223
    %v1327 = vunpack.c.l.b16 %v1224
    %v1328 = vunpack.c.l.b16 %v1225
    %v1329 = vunpack.c.l.b16 %v1226
    %v1330 = vunpack.c.l.b16 %v1227
    %v1331 = vunpack.c.l.b16 %v1228
    %v1332 = vunpack.c.l.b16 %v1229
    %v1333 = vunpack.c.l.b16 %v1230
    %v1334 = vunpack.c.l.b16 %v1231
    %v1335 = vunpack.c.l.b16 %v1232
    %v1336 = vunpack.c.l.b16 %v1233
    %v1337 = vunpack.c.l.b16 %v1234
    %v1338 = vunpack.c.l.b16 %v1235
    %v1339 = vunpack.c.l.b16 %v1236
    %v1340 = vunpack.c.l.b16 %v1237
    %v1341 = vunpack.c.l.b16 %v1238
    %v1342 = vunpack.c.l.b16 %v1239
    %v1343 = vunpack.c.l.b16 %v1240
    %v1344 = vunpack.c.l.b16 %v1241
    %v1345 = vunpack.c.l.b16 %v1242
    %v1346 = vunpack.c.l.b16 %v1243
    %v1347 = vunpack.c.l.b16 %v1244
    %v1348 = vunpack.c.l.b16 %v1245
    %v1349 = vunpack.c.l.b16 %v1246
    %v1350 = vunpack.c.l.b16 %v1247
    %v1351 = vunpack.c.l.b16 %v1248
    %v1352 = vunpack.c.l.b16 %v1249
    %v1353 = vunpack.c.l.b16 %v1250
    %v1354 = vunpack.c.l.b16 %v1251
    %v1355 = vunpack.c.l.b16 %v1252
    %v1356 = vunpack.c.l.b16 %v1253
    %v1357 = vunpack.c.l.b16 %v1254
    %v1358 = vunpack.c.l.b16 %v1255
    %v1359 = vunpack.c.l.b16 %v1256
    %v1360 = vunpack.c.l.b16 %v1257
    %v1361 = vunpack.c.l.b16 %v1258
    %v1362 = vunpack.c.l.b16 %v1259
    %v1363 = vunpack.c.l.b16 %v1260
    %v1364 = vunpack.c.l.b16 %v1261
    %v1365 = vunpack.c.l.b16 %v1262
    %v1366 = vunpack.c.l.b16 %v1263
    %v1367 = vunpack.c.l.b16 %v1264
    %v1368 = vunpack.c.l.b16 %v1265
    %v1369 = vunpack.c.l.b16 %v1266
    %v1370 = vunpack.c.l.b16 %v1267
    %v1371 = vpack.c.b16 %v1324, %v1323
    %v1372 = vpack.c.b16 %v1326, %v1325
    %v1373 = vpack.c.b16 %v1328, %v1327
    %v1374 = vpack.c.b16 %v1330, %v1329
    %v1375 = vpack.c.b16 %v1332, %v1331
    %v1376 = vpack.c.b16 %v1334, %v1333
    %v1377 = vpack.c.b16 %v1336, %v1335
    %v1378 = vpack.c.b16 %v1338, %v1337
    %v1379 = vpack.c.b16 %v1340, %v1339
    %v1380 = vpack.c.b16 %v1342, %v1341
    %v1381 = vpack.c.b16 %v1344, %v1343
    %v1382 = vpack.c.b16 %v1346, %v1345
    %v1383 = vpack.c.b16 %v1348, %v1347
    %v1384 = vpack.c.b16 %v1350, %v1349
    %v1385 = vpack.c.b16 %v1352, %v1351
    %v1386 = vpack.c.b16 %v1354, %v1353
    %v1387 = vpack.c.b16 %v1356, %v1355
    %v1388 = vpack.c.b16 %v1358, %v1357
    %v1389 = vpack.c.b16 %v1360, %v1359
    %v1390 = vpack.c.b16 %v1362, %v1361
    %v1391 = vpack.c.b16 %v1364, %v1363
    %v1392 = vpack.c.b16 %v1366, %v1365
    %v1393 = vpack.c.b16 %v1368, %v1367
    %v1394 = vpack.c.b16 %v1370, %v1369
    %1419 = vmatprep.subr.bf16.mxu0 0
    %1420 = vmatpush1.bf16.msra.mxu0 %v1371
    %1421 = vmatprep.subr.bf16.mxu0 0
    %1422 = vmatpush1.bf16.msra.mxu0 %v1372
    %1423 = vmatprep.subr.bf16.mxu0 0
    %1424 = vmatpush1.bf16.msra.mxu0 %v1373
    %1425 = vmatprep.subr.bf16.mxu0 0
    %1426 = vmatpush1.bf16.msra.mxu0 %v1374
    %1427 = vmatprep.subr.bf16.mxu0 0
    %1428 = vmatpush1.bf16.msra.mxu0 %v1375
    %1429 = vmatprep.subr.bf16.mxu0 0
    %1430 = vmatpush1.bf16.msra.mxu0 %v1376
    %1431 = vmatprep.subr.bf16.mxu0 0
    %1432 = vmatpush1.bf16.msra.mxu0 %v1377
    %1433 = vmatprep.subr.bf16.mxu0 0
    %1434 = vmatpush1.bf16.msra.mxu0 %v1378
    %1435 = vmatprep.subr.bf16.mxu0 0
    %1436 = vmatpush1.bf16.msra.mxu0 %v1379
    %1437 = vmatprep.subr.bf16.mxu0 0
    %1438 = vmatpush1.bf16.msra.mxu0 %v1380
    %1439 = vmatprep.subr.bf16.mxu0 0
    %1440 = vmatpush1.bf16.msra.mxu0 %v1381
    %1441 = vmatprep.subr.bf16.mxu0 0
    %1442 = vmatpush1.bf16.msra.mxu0 %v1382
    %1443 = vmatprep.subr.bf16.mxu0 0
    %1444 = vmatpush1.bf16.msra.mxu0 %v1383
    %1445 = vmatprep.subr.bf16.mxu0 0
    %1446 = vmatpush1.bf16.msra.mxu0 %v1384
    %1447 = vmatprep.subr.bf16.mxu0 0
    %1448 = vmatpush1.bf16.msra.mxu0 %v1385
    %1449 = vmatprep.subr.bf16.mxu0 0
    %1450 = vmatpush1.bf16.msra.mxu0 %v1386
    %1451 = vmatprep.mubr.bf16.mxu0 %v1218
    %1452 = vmatmul.mubr.bf16.gmra.mrb[0].mxu0 %v1217
    %v1453 = vpop.f32.mrb[0].mxu0
    %v1454 = vadd.f32 %v1273, %v1453
    %v1455 = vpop.f32.mrb[0].mxu0
    %v1456 = vpop.f32.mrb[0].mxu0
    %v1457 = vpop.f32.mrb[0].mxu0
    %1458 = vdwg.mxu0
    %1459 = vmatprep.subr.bf16.mxu0 0
    %1460 = vmatpush1.bf16.msra.mxu0 %v1387
    %1461 = vmatprep.subr.bf16.mxu0 0
    %1462 = vmatpush1.bf16.msra.mxu0 %v1388
    %1463 = vmatprep.subr.bf16.mxu0 0
    %1464 = vmatpush1.bf16.msra.mxu0 %v1389
    %1465 = vmatprep.subr.bf16.mxu0 0
    %1466 = vmatpush1.bf16.msra.mxu0 %v1390
    %1467 = vmatprep.subr.bf16.mxu0 0
    %1468 = vmatpush1.bf16.msra.mxu0 %v1391
    %1469 = vmatprep.subr.bf16.mxu0 0
    %1470 = vmatpush1.bf16.msra.mxu0 %v1392
    %1471 = vmatprep.subr.bf16.mxu0 0
    %1472 = vmatpush1.bf16.msra.mxu0 %v1393
    %1473 = vmatprep.subr.bf16.mxu0 0
    %1474 = vmatpush1.bf16.msra.mxu0 %v1394
    %1475 = vmatprep.subr.bf16.mxu0 0
    %1476 = vmatpush1.bf16.msra.mxu0 0
    %1477 = vmatprep.subr.bf16.mxu0 0
    %1478 = vmatpush1.bf16.msra.mxu0 0
    %1479 = vmatprep.subr.bf16.mxu0 0
    %1480 = vmatpush1.bf16.msra.mxu0 0
    %1481 = vmatprep.subr.bf16.mxu0 0
    %1482 = vmatpush1.bf16.msra.mxu0 0
    %1483 = vmatprep.subr.bf16.mxu0 0
    %1484 = vmatpush1.bf16.msra.mxu0 0
    %1485 = vmatprep.subr.bf16.mxu0 0
    %1486 = vmatpush1.bf16.msra.mxu0 0
    %1487 = vmatprep.subr.bf16.mxu0 0
    %1488 = vmatpush1.bf16.msra.mxu0 0
    %1489 = vmatprep.subr.bf16.mxu0 0
    %1490 = vmatpush1.bf16.msra.mxu0 0
    %1491 = vmatprep.mubr.bf16.mxu0 0
    %1492 = vmatmul.mubr.bf16.gmra.mrb[0].mxu0 %v1219
    %v1493 = vpop.f32.mrb[0].mxu0
    %v1494 = vadd.f32 %v1454, %v1493
    %v1495 = vpop.f32.mrb[0].mxu0
    %v1496 = vpop.f32.mrb[0].mxu0
    %v1497 = vpop.f32.mrb[0].mxu0
    %1498 = vdwg.mxu0
    %v1499 = vmax.f32 %v1494, 0.0
    %1500 = vadd.xlane.f32.xlu0 %v1499
    %v1501 = vpop.xlane.xlu0 %1500
    %v1502 = vsub.f32 %v1501, %v1499
    %1504 = vset.pattern.permute.xlu0 126
    %1505 = vperm.xlu0 %1504, %v1499
    %v1506 = vpop.permute.xlu0 %1505
    %v1508 = vadd.f32 %v1499, %v1506
    %v1509 = vlaneseq
    %v1510 = vand.u32 %v1509, 127
    %vm1511 = vcmp.eq.s32.totalorder %v1510, 127
    %1513 = vset.pattern.permute.xlu0 126
    %1514 = vperm.xlu0 %1513, %v1502
    %v1515 = vpop.permute.xlu0 %1514
    %v1517 = vsel %vm1511, %v1515, %v1508
    %1518 = vst [vmem:[#allocation11] sm:$0xff] %v1517
    // Predicated region
    $region58: #{tpu_custom_call.1} parent=1 // pred_check
      _
    $region59: #{tpu_custom_call.1} parent=1 // pred_check_branch
      %1520 = sbr.rel (0) target = $region61
    $region60: #{tpu_custom_call.1} parent=1 // pred_region
      %s1522 = ssub.s32 128, 128
      %1523 = vsyncadd [#allocation4], %s1522
      %s1525 = sshll.u32 [#allocation11], 4
      %s1526 = int_to_ptr.vmem [resolvable:$true] %s1525
      %1528 = dma.vmem_to_hbm [thread:$0]  %s1526, 128, %s9, [#allocation4]
    $region61: #{tpu_custom_call.1} parent=1 // pred_fallthru
      _
    // Predicated region
    $region62: #{tpu_custom_call.1} parent=1 // pred_check
      _
    $region63: #{tpu_custom_call.1} parent=1 // pred_check_branch
      %1530 = sbr.rel (0) target = $region65
    $region64: #{tpu_custom_call.1} parent=1 // pred_region
      %1531 = dma.done [#allocation4], 128
    $region65: #{tpu_custom_call.1} parent=1 // pred_fallthru
      _
    %1532 = vsyncpa [#allocation3], 1
    %1533 = vsyncpa [#allocation6], 1
    %1534 = vsyncpa [#allocation9], 1
    %1535 = vsyncpa [#allocation4], 1

</llo_original>
